<compile_context>
chip_gen: v7x
topology: tpu7x:2x2x1
jax: 0.10.0
libtpu: 0.0.40
codegen_flags: <defaults>
</compile_context>

<pallas_src>
import functools

import jax
import jax.numpy as jnp
from jax.experimental import pallas as pl
from jax.experimental.pallas import tpu as pltpu

_LANE = 128          # TPU vreg lane width
_SUBLANE = 8         # TPU vreg sublane count
_MAX_ROW_TILE = 256  # v6e/v7x MXU height; also a multiple of 128 for v5e


def _round_up(n, m):
    return ((n + m - 1) // m) * m


def _action_kernel(h_ref, w_ref, b_ref, out_ref, *, n_valid):
    # fc: MXU matmul with f32 accumulate.  h is (tile_m, D_in) unpadded; W is
    # (D_in, d_out_p) with only the class axis zero-padded to 128 lanes.
    z = jnp.dot(h_ref[...], w_ref[...], preferred_element_type=jnp.float32)
    z = z + b_ref[...]  # (1, d_out_p) bias broadcast — pure VPU add.

    # Mask padded class lanes so they contribute 0 to the softmax denominator.
    col = jax.lax.broadcasted_iota(jnp.int32, z.shape, 1)
    z = jnp.where(col < n_valid, z, jnp.float32(-1e30))

    # Numerically stable log_softmax along the class (lane) axis, all in f32.
    m = jnp.max(z, axis=-1, keepdims=True)
    e = jnp.exp(z - m)
    denom = jnp.sum(e, axis=-1, keepdims=True)
    out_ref[...] = (z - m - jnp.log(denom)).astype(out_ref.dtype)


def prepare_action_params(weight, bias):
    """One-time parameter prep (hoisted out of the per-step path).

    weight: (D_out, D_in) torch nn.Linear layout; bias: (D_out,).
    Returns:
      w_p: (D_in, d_out_p) f32 — weight.T with class axis zero-padded to 128k.
      b_p: (1, d_out_p) f32   — bias zero-padded the same way.
    """
    D_out, D_in = weight.shape
    d_out_p = _round_up(max(D_out, _LANE), _LANE)
    w_p = jnp.zeros((D_in, d_out_p), jnp.float32).at[:, :D_out].set(
        weight.T.astype(jnp.float32))
    b_p = jnp.zeros((1, d_out_p), jnp.float32).at[:, :D_out].set(
        bias.astype(jnp.float32))
    return w_p, b_p


@functools.partial(jax.jit, static_argnames=("d_out",))
def action_network_forward(h_t, w_p, b_p, *, d_out):
    """a_t = log_softmax(h_t @ W^T + b, axis=1).

    h_t: (B, D_in) raw activation (not padded); w_p/b_p from prepare_action_params.
    Returns (B, d_out).
    """
    B, D_in = h_t.shape
    d_out_p = w_p.shape[1]

    # Row tile: whole batch if small (full-array dims are exempt from the
    # (8,128) rule), else 256-row tiles; ragged last tile rows are row-wise
    # independent and their out-of-bounds writes are dropped by Pallas.
    tile_m = B if B <= _MAX_ROW_TILE else _MAX_ROW_TILE
    grid = (pl.cdiv(B, tile_m),)

    kernel = functools.partial(_action_kernel, n_valid=d_out)

    cost = pl.CostEstimate(
        flops=2 * B * D_in * d_out_p,
        transcendentals=B * d_out_p,
        bytes_accessed=4 * (B * D_in + D_in * d_out_p + d_out_p + B * d_out_p),
    )

    out_padded = pl.pallas_call(
        kernel,
        out_shape=jax.ShapeDtypeStruct((B, d_out_p), jnp.float32),
        grid=grid,
        in_specs=[
            pl.BlockSpec((tile_m, D_in), lambda i: (i, 0)),     # rows tiled
            pl.BlockSpec((D_in, d_out_p), lambda i: (0, 0)),    # W resident
            pl.BlockSpec((1, d_out_p), lambda i: (0, 0)),       # bias resident
        ],
        out_specs=pl.BlockSpec((tile_m, d_out_p), lambda i: (i, 0)),
        compiler_params=pltpu.CompilerParams(
            dimension_semantics=("parallel",)),  # both v7x TCs on the row axis
        cost_estimate=cost,
    )(h_t.astype(jnp.float32), w_p, b_p)

    # Slice back to the module's (B, D_out) contract.  If the consumer can take
    # the lane-dense 128-wide slab (padded lanes hold ~-1e30), drop this slice.
    return out_padded[:, :d_out]


if __name__ == "__main__":
    # Module hyperparameters (linear softmax classifier over classes).
    input_size = 32
    output_size = 10
    B = 8

    key = jax.random.PRNGKey(0)
    k_h, k_w, k_b = jax.random.split(key, 3)

    # Deterministic nn.Linear-style uniform init.
    bound = 1.0 / (input_size ** 0.5)
    weight = jax.random.uniform(
        k_w, (output_size, input_size), jnp.float32, -bound, bound
    )
    bias = jax.random.uniform(k_b, (output_size,), jnp.float32, -bound, bound)

    h_t = jax.random.normal(k_h, (B, input_size), jnp.float32)

    # One-time parameter prep (would live at module init in a real model).
    w_p, b_p = prepare_action_params(weight, bias)

    a_t = action_network_forward(h_t, w_p, b_p, d_out=output_size)
    a_t = jax.block_until_ready(a_t)

    # Reference check in plain JAX.
    logits_ref = h_t @ weight.T + bias
    a_ref = jax.nn.log_softmax(logits_ref, axis=1)
    assert a_t.shape == (B, output_size)
    assert jnp.allclose(a_t, a_ref, atol=1e-5), "log_softmax output mismatch"
    # Sanity: rows are valid log-probabilities (sum of exp == 1).
    assert jnp.allclose(jnp.sum(jnp.exp(a_t), axis=1), 1.0, atol=1e-5)

    print("KERNEL_OK")
</pallas_src>

<mosaic_0001>
module attributes {stable_mosaic.version = 11 : i64} {
  func.func @_action_kernel(%arg0: i32, %arg1: memref<8x32xf32, #tpu.memory_space<vmem>>, %arg2: memref<32x128xf32, #tpu.memory_space<vmem>>, %arg3: memref<1x128xf32, #tpu.memory_space<vmem>>, %arg4: memref<8x128xf32, #tpu.memory_space<vmem>>) attributes {dimension_semantics = [#tpu.dimension_semantics<parallel>], iteration_bounds = array<i64: 1>, scalar_prefetch = 0 : i64, scratch_operands = 0 : i64, tpu.core_type = #tpu.core_type<tc>, window_params = [{transform_indices = @transform_0, window_bounds = array<i64: 8, 32>}, {pipeline_mode = #tpu.pipeline_mode<synchronous>, transform_indices = @transform_1, window_bounds = array<i64: 32, 128>}, {pipeline_mode = #tpu.pipeline_mode<synchronous>, transform_indices = @transform_2, window_bounds = array<i64: 1, 128>}, {transform_indices = @transform_3, window_bounds = array<i64: 8, 128>}]} {
    %c0 = arith.constant 0 : index
    %c0_0 = arith.constant 0 : index
    %0 = vector.load %arg1[%c0, %c0_0] : memref<8x32xf32, #tpu.memory_space<vmem>>, vector<8x32xf32>
    %c0_1 = arith.constant 0 : index
    %c0_2 = arith.constant 0 : index
    %1 = vector.load %arg2[%c0_1, %c0_2] : memref<32x128xf32, #tpu.memory_space<vmem>>, vector<32x128xf32>
    %cst = arith.constant dense<0.000000e+00> : vector<8x128xf32>
    %2 = tpu.matmul %0, %1, %cst {dimension_numbers = #tpu.dot_dimension_numbers<[1], [0], [0], [1], [0, 0, 1, 1], [], []>} : vector<8x32xf32>, vector<32x128xf32>, vector<8x128xf32> -> vector<8x128xf32>
    %c0_3 = arith.constant 0 : index
    %c0_4 = arith.constant 0 : index
    %3 = vector.load %arg3[%c0_3, %c0_4] : memref<1x128xf32, #tpu.memory_space<vmem>>, vector<1x128xf32>
    %4 = vector.broadcast %3 : vector<1x128xf32> to vector<8x128xf32>
    %5 = arith.addf %2, %4 : vector<8x128xf32>
    %6 = tpu.iota {dimensions = array<i32: 1>} : vector<8x128xi32>
    %c10_i32 = arith.constant 10 : i32
    %7 = vector.broadcast %c10_i32 : i32 to vector<8x128xi32>
    %8 = arith.cmpi slt, %6, %7 : vector<8x128xi32>
    %cst_5 = arith.constant -1.000000e+30 : f32
    %9 = vector.broadcast %cst_5 : f32 to vector<8x128xf32>
    %10 = arith.select %8, %5, %9 : vector<8x128xi1>, vector<8x128xf32>
    %cst_6 = arith.constant dense<0xFF800000> : vector<8xf32>
    %11 = vector.multi_reduction <maximumf>, %10, %cst_6 [1] : vector<8x128xf32> to vector<8xf32>
    %12 = vector.shape_cast %11 : vector<8xf32> to vector<8x1xf32>
    %13 = vector.broadcast %12 : vector<8x1xf32> to vector<8x128xf32>
    %14 = arith.subf %10, %13 : vector<8x128xf32>
    %15 = math.exp %14 : vector<8x128xf32>
    %cst_7 = arith.constant dense<0.000000e+00> : vector<8xf32>
    %16 = vector.multi_reduction <add>, %15, %cst_7 [1] : vector<8x128xf32> to vector<8xf32>
    %17 = vector.shape_cast %16 : vector<8xf32> to vector<8x1xf32>
    %18 = vector.broadcast %12 : vector<8x1xf32> to vector<8x128xf32>
    %19 = arith.subf %10, %18 : vector<8x128xf32>
    %20 = math.log %17 : vector<8x1xf32>
    %21 = vector.broadcast %20 : vector<8x1xf32> to vector<8x128xf32>
    %22 = arith.subf %19, %21 : vector<8x128xf32>
    %c0_8 = arith.constant 0 : index
    %c0_9 = arith.constant 0 : index
    %23 = vector.load %arg4[%c0_8, %c0_9] : memref<8x128xf32, #tpu.memory_space<vmem>>, vector<8x128xf32>
    tpu.vector_store %arg4[%c0_8, %c0_9], %22 {strides = array<i32>} : memref<8x128xf32, #tpu.memory_space<vmem>>, vector<8x128xf32>,
    return
  }
  func.func @transform_0(%arg0: i32) -> (i32, i32) {
    %c0_i32 = arith.constant 0 : i32
    %c0_i32_0 = arith.constant 0 : i32
    return %arg0, %c0_i32 : i32, i32
  }
  func.func @transform_1(%arg0: i32) -> (i32, i32) {
    %c0_i32 = arith.constant 0 : i32
    %c0_i32_0 = arith.constant 0 : i32
    %c0_i32_1 = arith.constant 0 : i32
    return %c0_i32, %c0_i32_0 : i32, i32
  }
  func.func @transform_2(%arg0: i32) -> (i32, i32) {
    %c0_i32 = arith.constant 0 : i32
    %c0_i32_0 = arith.constant 0 : i32
    %c0_i32_1 = arith.constant 0 : i32
    return %c0_i32, %c0_i32_0 : i32, i32
  }
  func.func @transform_3(%arg0: i32) -> (i32, i32) {
    %c0_i32 = arith.constant 0 : i32
    %c0_i32_0 = arith.constant 0 : i32
    return %arg0, %c0_i32 : i32, i32
  }
}

</mosaic_0001>

<llo_original>
// kernel: action_network_forward.1
$region0: #{action_network_forward.1}
  #allocation0 [shape = 'u32[]', space=smem, size = 0x4, offset = 0x4, fixed_abs, tag = 'smem constant byte address 0x4 - core index']
  #allocation1 [shape = 'u32[144,128]{1,0:T(1,128)}', space=vmem, size = 0x12000, scoped, tag = 'internal scratch']
  %s0 = inlined_call_operand.hbm [shape: f32[8,32], index: 0, kind: input, shape index: {}]
  %s1 = inlined_call_operand.hbm [shape: f32[32,128], index: 1, kind: input, shape index: {}]
  %s2 = inlined_call_operand.vmem [shape: f32[1,128], index: 2, kind: input, shape index: {}]
  %s3 = inlined_call_operand.hbm [shape: f32[8,128], index: 3, kind: output, shape index: {}]
  %s4 = sld [smem:[#allocation0]]
  $region30: #{action_network_forward.1} parent=0
    _
  %s6 = ssub.s32 1, %s4
  %s7 = scalar_select 0, %s6, %s4
  $region1: #{action_network_forward.1} parent=0
    #allocation2 [shape = 'u8[4096]{0}', space=vmem, size = 0x1000, scoped, tag = 'input window, operand 0, single buffered']
    #allocation3 [shape = 's32[1]{0}', space=sflag, size = 0x4, scoped, tag = 'scoped memory for action_network_forward.1']
    #allocation4 [shape = 's32[1]{0}', space=sflag, size = 0x4, scoped, tag = 'scoped memory for action_network_forward.1']
    #allocation5 [shape = 'u8[16384]{0}', space=vmem, size = 0x4000, scoped, tag = 'input window, operand 1, single buffered']
    #allocation6 [shape = 's32[1]{0}', space=sflag, size = 0x4, scoped, tag = 'scoped memory for action_network_forward.1']
    #allocation7 [shape = 'u8[4096]{0}', space=vmem, size = 0x1000, scoped, tag = 'output window, operand 0, single buffered']
    %8 = vsyncpa [#allocation3], 0
    %9 = vsyncpa [#allocation6], 0
    %10 = vsyncpa [#allocation4], 0
    // Predicated region
    $region2: #{action_network_forward.1} parent=1 // pred_check
      _
    $region3: #{action_network_forward.1} parent=1 // pred_check_branch
      %12 = sbr.rel (0) target = $region5
    $region4: #{action_network_forward.1} parent=1 // pred_region
      %s14 = ssub.s32 128, 128
      %15 = vsyncadd [#allocation3], %s14
      %s17 = sshll.u32 [#allocation2], 4
      %s18 = int_to_ptr.vmem [resolvable:$true] %s17
      %20 = dma.hbm_to_vmem [thread:$0]  %s0, 128, %s18, [#allocation3]
    $region5: #{action_network_forward.1} parent=1 // pred_fallthru
      _
    // Predicated region
    $region6: #{action_network_forward.1} parent=1 // pred_check
      _
    $region7: #{action_network_forward.1} parent=1 // pred_check_branch
      %22 = sbr.rel (0) target = $region9
    $region8: #{action_network_forward.1} parent=1 // pred_region
      %s24 = ssub.s32 512, 512
      %25 = vsyncadd [#allocation6], %s24
      %s26 = sshll.u32 [#allocation5], 4
      %s27 = int_to_ptr.vmem [resolvable:$true] %s26
      %32 = dma.hbm_to_vmem [thread:$0]  %s1, 512, %s27, [#allocation6], 128, 128, 8
    $region9: #{action_network_forward.1} parent=1 // pred_fallthru
      _
    // Predicated region
    $region10: #{action_network_forward.1} parent=1 // pred_check
      _
    $region11: #{action_network_forward.1} parent=1 // pred_check_branch
      %34 = sbr.rel (0) target = $region13
    $region12: #{action_network_forward.1} parent=1 // pred_region
      _
    $region13: #{action_network_forward.1} parent=1 // pred_fallthru
      _
    // Predicated region
    $region14: #{action_network_forward.1} parent=1 // pred_check
      _
    $region15: #{action_network_forward.1} parent=1 // pred_check_branch
      %36 = sbr.rel (0) target = $region17
    $region16: #{action_network_forward.1} parent=1 // pred_region
      %37 = dma.done [#allocation3], 128
    $region17: #{action_network_forward.1} parent=1 // pred_fallthru
      _
    // Predicated region
    $region18: #{action_network_forward.1} parent=1 // pred_check
      _
    $region19: #{action_network_forward.1} parent=1 // pred_check_branch
      %39 = sbr.rel (0) target = $region21
    $region20: #{action_network_forward.1} parent=1 // pred_region
      %40 = dma.done [#allocation6], 512
    $region21: #{action_network_forward.1} parent=1 // pred_fallthru
      _
    %v41 = vld [vmem:[#allocation2] sm:$0xff]
    %v42 = vld [vmem:[#allocation5] sm:$0xff]
    %v43 = vld [vmem:[#allocation5 + $0x8] sm:$0xff]
    %v44 = vld [vmem:[#allocation5 + $0x10] sm:$0xff]
    %v45 = vld [vmem:[#allocation5 + $0x18] sm:$0xff]
    %v46 = vld [vmem:[%s2] sm:$0x1]
    %v48 = vlaneseq
    %v49 = vshrl.u32 %v48, 7
    %v50 = vsub.s32 0, %v49
    %v51 = vrot.slane %v46, %v50
    %vm53 = vcmask 261120
    %v55 = vsel %vm53, %v41, 0
    %57 = vmatprep.subr.mxu0 0.0
    %58 = vmatpush1.msra.mxu0 %v42
    %59 = vmatprep.subr.mxu0 0.0
    %60 = vmatpush1.msra.mxu0 %v43
    %61 = vmatprep.subr.mxu0 0.0
    %62 = vmatpush1.msra.mxu0 %v44
    %63 = vmatprep.subr.mxu0 0.0
    %64 = vmatpush1.msra.mxu0 %v45
    %65 = vmatprep.subr.mxu0 0.0
    %66 = vmatpush1.msra.mxu0 0.0
    %67 = vmatprep.subr.mxu0 0.0
    %68 = vmatpush1.msra.mxu0 0.0
    %69 = vmatprep.subr.mxu0 0.0
    %70 = vmatpush1.msra.mxu0 0.0
    %71 = vmatprep.subr.mxu0 0.0
    %72 = vmatpush1.msra.mxu0 0.0
    %73 = vmatprep.subr.mxu0 0.0
    %74 = vmatpush1.msra.mxu0 0.0
    %75 = vmatprep.subr.mxu0 0.0
    %76 = vmatpush1.msra.mxu0 0.0
    %77 = vmatprep.subr.mxu0 0.0
    %78 = vmatpush1.msra.mxu0 0.0
    %79 = vmatprep.subr.mxu0 0.0
    %80 = vmatpush1.msra.mxu0 0.0
    %81 = vmatprep.subr.mxu0 0.0
    %82 = vmatpush1.msra.mxu0 0.0
    %83 = vmatprep.subr.mxu0 0.0
    %84 = vmatpush1.msra.mxu0 0.0
    %85 = vmatprep.subr.mxu0 0.0
    %86 = vmatpush1.msra.mxu0 0.0
    %87 = vmatprep.subr.mxu0 0.0
    %88 = vmatpush1.msra.mxu0 0.0
    %89 = vmatprep.subr.mxu0 0.0
    %90 = vmatpush1.msra.mxu0 0.0
    %91 = vmatprep.subr.mxu0 0.0
    %92 = vmatpush1.msra.mxu0 0.0
    %93 = vmatprep.subr.mxu0 0.0
    %94 = vmatpush1.msra.mxu0 0.0
    %95 = vmatprep.subr.mxu0 0.0
    %96 = vmatpush1.msra.mxu0 0.0
    %97 = vmatprep.subr.mxu0 0.0
    %98 = vmatpush1.msra.mxu0 0.0
    %99 = vmatprep.subr.mxu0 0.0
    %100 = vmatpush1.msra.mxu0 0.0
    %101 = vmatprep.subr.mxu0 0.0
    %102 = vmatpush1.msra.mxu0 0.0
    %103 = vmatprep.subr.mxu0 0.0
    %104 = vmatpush1.msra.mxu0 0.0
    %105 = vmatprep.subr.mxu0 0.0
    %106 = vmatpush1.msra.mxu0 0.0
    %107 = vmatprep.subr.mxu0 0.0
    %108 = vmatpush1.msra.mxu0 0.0
    %109 = vmatprep.subr.mxu0 0.0
    %110 = vmatpush1.msra.mxu0 0.0
    %111 = vmatprep.subr.mxu0 0.0
    %112 = vmatpush1.msra.mxu0 0.0
    %113 = vmatprep.subr.mxu0 0.0
    %114 = vmatpush1.msra.mxu0 0.0
    %115 = vmatprep.subr.mxu0 0.0
    %116 = vmatpush1.msra.mxu0 0.0
    %117 = vmatprep.subr.mxu0 0.0
    %118 = vmatpush1.msra.mxu0 0.0
    %119 = vmatprep.subr.mxu0 0.0
    %120 = vmatpush1.msra.mxu0 0.0
    %121 = vmatprep.mubr.f32.mxu0 0.0
    %122 = vmatmul.mubr.f32.gmra.mrb[0].mxu0 %v55
    %v123 = vpop.f32.mrb[0].mxu0
    %v124 = vadd.f32 %v51, %v123
    %v125 = vpop.f32.mrb[0].mxu0
    %126 = vdwg.mxu0
    %v127 = vlaneseq
    %v128 = vand.u32 %v127, 127
    %vm129 = vcmp.lt.s32.totalorder %v128, 10
    %v130 = vsel %vm129, %v124, -1e+30
    %131 = vmax.xlane.f32.xlu0 %v130
    %v132 = vpop.xlane.xlu0 %131
    %v133 = vsub.f32 %v130, %v132
    %v134 = vmul.f32 %v133, 1.442695
    %v135 = vpow.pop %v134
    %136 = vadd.xlane.f32.xlu0 %v135
    %v137 = vpop.xlane.xlu0 %136
    %v138 = vlog2.pop %v137
    %v139 = vmul.f32 %v138, 0.6931472
    %v140 = vsub.f32 %v133, %v139
    %141 = vst [vmem:[#allocation7] sm:$0xff] %v140
    // Predicated region
    $region22: #{action_network_forward.1} parent=1 // pred_check
      _
    $region23: #{action_network_forward.1} parent=1 // pred_check_branch
      %143 = sbr.rel (0) target = $region25
    $region24: #{action_network_forward.1} parent=1 // pred_region
      %s145 = ssub.s32 128, 128
      %146 = vsyncadd [#allocation4], %s145
      %s148 = sshll.u32 [#allocation7], 4
      %s149 = int_to_ptr.vmem [resolvable:$true] %s148
      %151 = dma.vmem_to_hbm [thread:$0]  %s149, 128, %s3, [#allocation4]
    $region25: #{action_network_forward.1} parent=1 // pred_fallthru
      _
    // Predicated region
    $region26: #{action_network_forward.1} parent=1 // pred_check
      _
    $region27: #{action_network_forward.1} parent=1 // pred_check_branch
      %153 = sbr.rel (0) target = $region29
    $region28: #{action_network_forward.1} parent=1 // pred_region
      %154 = dma.done [#allocation4], 128
    $region29: #{action_network_forward.1} parent=1 // pred_fallthru
      _
    %155 = vsyncpa [#allocation3], 1
    %156 = vsyncpa [#allocation6], 1
    %157 = vsyncpa [#allocation4], 1

</llo_original>
